<compile_context>
chip_gen: v6e
topology: v6e:2x2x1
jax: 0.10.0
libtpu: 0.0.40
codegen_flags: <defaults>
</compile_context>

<pallas_src>
import functools

import jax
import jax.numpy as jnp
from jax.experimental import pallas as pl
from jax.experimental.pallas import tpu as pltpu

# ----------------------------- config (small) ------------------------------
BATCH = 2
SEQ_LEN = 16
VOCAB_SIZE = 50
EMBED_DIM = 32
FILTER_SIZES = (3, 4, 5)
NUM_FILTERS = (8, 8, 8)
OUTPUT_DIM = 2
UNK_TOKEN = 0
PAD_TOKEN = 1
# cnn_out_dropout = 0.0 (identity at inference), topic_dim = 0 (no concat)


def _round_up(x, m):
    return ((x + m - 1) // m) * m


KMAX = max(FILTER_SIZES)            # im2col depth = KMAX * EMBED_DIM = 160
F_TOTAL = sum(NUM_FILTERS)          # 24 real pooled features
F_PAD = 128                         # lane-dense slab width for pooled features
OUT_PAD = _round_up(OUTPUT_DIM, 8)  # 8-lane padded FC output (low writeback)


# --------------------------------- kernel ----------------------------------
def _embed_cnn_kernel(ids_ref, embed_ref, wconv_ref, bconv_ref, wfc_ref,
                      bfc_ref, out_ref, *, seq_len, filter_sizes, num_filters):
    L = seq_len
    tb, _ = ids_ref.shape
    n = tb * L
    v_pad, _ = embed_ref.shape
    f_pad = wconv_ref.shape[1]
    kmax = max(filter_sizes)
    cdtype = embed_ref.dtype                       # compute dtype (bf16 or f32)

    # ---- in-kernel embedding gather: one-hot(ids) @ embed on the MXU ------
    ids = ids_ref[...]                                          # (tb, L) int32
    cmp = ids[:, :, None] == jax.lax.broadcasted_iota(
        jnp.int32, (tb, L, v_pad), 2)
    onehot = jnp.where(cmp, 1.0, 0.0).astype(cdtype).reshape(n, v_pad)
    x = jnp.dot(onehot, embed_ref[...], preferred_element_type=jnp.float32)

    # ---- im2col via sublane rolls (XLU; 8-sublane aligned, no slices) -----
    # Column group dk holds x shifted so row r sees token r + dk.  Rolls act
    # on f32 rows (before the bf16 cast) to avoid odd-shift relayouts of
    # packed bf16 sublanes on v5e.  Wrapped rows only land in positions that
    # are masked before the max-pool, and the fused weight has zero rows for
    # dk >= k of each filter group (invariant: every *valid* output row r has
    # r + dk <= L - 1, so it never crosses a sentence boundary).
    cols = [x]
    for dk in range(1, kmax):
        cols.append(pltpu.roll(x, shift=n - dk, axis=0))   # == jnp.roll(x,-dk,0)
    im2col = jnp.concatenate(cols, axis=1).astype(cdtype)       # (n, kmax*E)

    # ---- ONE fused MXU matmul for all rows, shifts and filter sizes -------
    conv = jnp.dot(im2col, wconv_ref[...], preferred_element_type=jnp.float32)
    conv = conv.reshape(tb, L, f_pad)                           # per sentence

    # ---- mask rows past each filter's valid length, max-pool per sentence -
    row = jax.lax.broadcasted_iota(jnp.int32, (L, f_pad), 0)
    lane = jax.lax.broadcasted_iota(jnp.int32, (L, f_pad), 1)
    bound = jnp.full((L, f_pad), L, jnp.int32)        # padding lanes: all rows
    off = 0
    for k, f in zip(filter_sizes, num_filters):
        bound = jnp.where((lane >= off) & (lane < off + f), L - k + 1, bound)
        off += f
    valid = row < bound                                         # (L, f_pad)
    pooled = jnp.max(jnp.where(valid[None], conv, -jnp.inf), axis=1)
    # Bias + ReLU deferred past the pool (exact: bias constant over the
    # pooled axis, ReLU monotone).  Padding lanes stay 0 (zero W cols, zero b).
    pooled = jnp.maximum(pooled + bconv_ref[...], 0.0)          # (tb, f_pad)

    # ---- per-row min-max scale over the real feature lanes only -----------
    real = jax.lax.broadcasted_iota(jnp.int32, (tb, f_pad), 1) < off
    mn = jnp.min(jnp.where(real, pooled, jnp.inf), axis=1, keepdims=True)
    mx = jnp.max(jnp.where(real, pooled, -jnp.inf), axis=1, keepdims=True)
    # ScaleTensor: no epsilon (NaN if a row is constant), matching torch.
    inv = pl.reciprocal(mx - mn, approx=False)          # EUP slot, not VPU div
    scaled = (pooled - mn) * inv
    # Garbage in padding lanes of `scaled` hits zero rows of wfc -> adds 0.

    # dropout(p=0.0) is identity; topic_dim = 0 -> no extra concat.
    out_ref[...] = (
        jnp.dot(scaled, wfc_ref[...], preferred_element_type=jnp.float32)
        + bfc_ref[...]
    )


# -------------------------------- wrapper -----------------------------------
def _pick_batch_tile(batch, target=256):
    """Sentences per grid step.  Guarantees >= 2 grid steps once batch >= 16
    (so ("parallel",) can shard across both v7x TensorCores) and keeps the
    in-kernel temporaries (~tens of KB/sentence) well under the default
    scoped-VMEM limits (16 MiB v5e / 32 MiB v6e & v7x) at target=256.
    Re-derive the ceiling per generation (and raise vmem_limit_bytes) before
    growing `target` — v7x has half the physical VMEM of v5e/v6e."""
    if batch < 16:
        return batch                    # single block == full array dims
    tb = min(target, ((batch // 2) // 8) * 8)
    return max(tb, 8)


def pack_params(params, *, compute_dtype=jnp.bfloat16,
                f_pad=F_PAD, out_pad=OUT_PAD):
    """Pad the embed table, fuse conv weights/biases, and pad the FC layer
    into lane-dense zero-padded slabs consumed by the kernel.  Done once,
    outside the hot path (weights are stored in compute_dtype)."""
    V, E = params["embed"].shape
    v_pad = _round_up(V, 8)
    embed = jnp.zeros((v_pad, E), jnp.float32).at[:V].set(params["embed"])
    wconv = jnp.zeros((KMAX * E, f_pad), jnp.float32)
    bconv = jnp.zeros((1, f_pad), jnp.float32)
    off = 0
    for k, f, wname, bname in zip(
        FILTER_SIZES, NUM_FILTERS, ("w3", "w4", "w5"), ("b3", "b4", "b5")
    ):
        w = params[wname]                                    # (k, E, f)
        for dk in range(k):
            wconv = wconv.at[dk * E:(dk + 1) * E, off:off + f].set(w[dk])
        bconv = bconv.at[0, off:off + f].set(params[bname][0])
        off += f
    wfc = jnp.zeros((f_pad, out_pad), jnp.float32)
    wfc = wfc.at[:off, :OUTPUT_DIM].set(params["wfc"])
    bfc = jnp.zeros((1, out_pad), jnp.float32)
    bfc = bfc.at[0, :OUTPUT_DIM].set(params["bfc"][0])
    return {"embed": embed.astype(compute_dtype),
            "wconv": wconv.astype(compute_dtype),
            "bconv": bconv, "wfc": wfc, "bfc": bfc}


def embed_cnn_forward(sentence, packed, *, batch_tile=None):
    """sentence: (B, L) int32 token ids -> (B, OUTPUT_DIM) f32 logits."""
    B, L = sentence.shape
    assert L >= KMAX, "need at least one valid conv position per filter"
    assert L % 8 == 0, "sublane-aligned sentence length expected"
    v_pad, E = packed["embed"].shape
    f_pad = packed["wconv"].shape[1]
    out_pad = packed["wfc"].shape[1]

    tb = batch_tile if batch_tile is not None else _pick_batch_tile(B)
    grid = pl.cdiv(B, tb)
    b_pad = grid * tb
    if b_pad != B:                      # pad tail sentences; cropped below
        sentence = jnp.pad(sentence, ((0, b_pad - B), (0, 0)),
                           constant_values=PAD_TOKEN)

    kernel = functools.partial(
        _embed_cnn_kernel, seq_len=L,
        filter_sizes=FILTER_SIZES, num_filters=NUM_FILTERS)

    w_item = jnp.dtype(packed["embed"].dtype).itemsize
    cost = pl.CostEstimate(
        flops=2 * b_pad * L * (v_pad * E + KMAX * E * f_pad)
        + 2 * b_pad * f_pad * out_pad,
        transcendentals=b_pad,
        bytes_accessed=4 * b_pad * L + 4 * b_pad * out_pad
        + w_item * (v_pad * E + KMAX * E * f_pad)
        + 4 * (f_pad + f_pad * out_pad + out_pad))

    out = pl.pallas_call(
        kernel,
        out_shape=jax.ShapeDtypeStruct((b_pad, out_pad), jnp.float32),
        grid=(grid,),
        in_specs=[
            pl.BlockSpec((tb, L), lambda b: (b, 0)),            # token ids
            pl.BlockSpec((v_pad, E), lambda b: (0, 0)),         # embed table
            pl.BlockSpec((KMAX * E, f_pad), lambda b: (0, 0)),  # fused conv W
            pl.BlockSpec((1, f_pad), lambda b: (0, 0)),         # fused conv b
            pl.BlockSpec((f_pad, out_pad), lambda b: (0, 0)),   # padded FC W
            pl.BlockSpec((1, out_pad), lambda b: (0, 0)),       # padded FC b
        ],
        out_specs=pl.BlockSpec((tb, out_pad), lambda b: (b, 0)),
        compiler_params=pltpu.CompilerParams(
            dimension_semantics=("parallel",)),                 # v7x: 2 TCs
        cost_estimate=cost,
    )(sentence, packed["embed"], packed["wconv"], packed["bconv"],
      packed["wfc"], packed["bfc"])
    return out[:B, :OUTPUT_DIM]


# ----------------------------- params / reference ---------------------------
def init_params(key):
    keys = jax.random.split(key, 9)
    embed = jax.random.normal(keys[0], (VOCAB_SIZE, EMBED_DIM), jnp.float32)
    # unk / pad rows zeroed, as in the module's __init__
    embed = embed.at[UNK_TOKEN].set(0.0).at[PAD_TOKEN].set(0.0)

    def conv_w(k, F_, kk):
        scale = 1.0 / jnp.sqrt(jnp.float32(EMBED_DIM * kk))
        return scale * jax.random.normal(k, (kk, EMBED_DIM, F_), jnp.float32)

    return {
        "embed": embed,
        "w3": conv_w(keys[1], NUM_FILTERS[0], FILTER_SIZES[0]),
        "b3": 0.01 * jax.random.normal(keys[2], (1, NUM_FILTERS[0]), jnp.float32),
        "w4": conv_w(keys[3], NUM_FILTERS[1], FILTER_SIZES[1]),
        "b4": 0.01 * jax.random.normal(keys[4], (1, NUM_FILTERS[1]), jnp.float32),
        "w5": conv_w(keys[5], NUM_FILTERS[2], FILTER_SIZES[2]),
        "b5": 0.01 * jax.random.normal(keys[6], (1, NUM_FILTERS[2]), jnp.float32),
        "wfc": (1.0 / jnp.sqrt(jnp.float32(F_TOTAL)))
        * jax.random.normal(keys[7], (F_TOTAL, OUTPUT_DIM), jnp.float32),
        "bfc": 0.01 * jax.random.normal(keys[8], (1, OUTPUT_DIM), jnp.float32),
    }


def reference_forward(sentence, params):
    """Pure-JAX reference mirroring the PyTorch forward (for validation)."""
    x = jnp.take(params["embed"], sentence, axis=0)          # (B, L, E)
    B, L, _ = x.shape
    pools = []
    for k, f, wname, bname in zip(
        FILTER_SIZES, NUM_FILTERS, ("w3", "w4", "w5"), ("b3", "b4", "b5")
    ):
        lout = L - k + 1
        acc = jnp.zeros((B, lout, f), jnp.float32)
        for dk in range(k):
            acc = acc + jnp.einsum(
                "ble,ef->blf", x[:, dk:dk + lout, :], params[wname][dk]
            )
        acc = jnp.maximum(acc + params[bname][None, :, :], 0.0)
        pools.append(jnp.max(acc, axis=1))
    cat = jnp.concatenate(pools, axis=1)
    mn = jnp.min(cat, axis=1, keepdims=True)
    mx = jnp.max(cat, axis=1, keepdims=True)
    scaled = (cat - mn) / (mx - mn)
    return scaled @ params["wfc"] + params["bfc"]


if __name__ == "__main__":
    key = jax.random.PRNGKey(0)
    pkey, skey = jax.random.split(key)
    params = init_params(pkey)
    sentence = jax.random.randint(
        skey, (BATCH, SEQ_LEN), minval=0, maxval=VOCAB_SIZE, dtype=jnp.int32
    )

    ref = reference_forward(sentence, params)

    # Production path: bf16 compute (full MXU rate), f32 accumulation.
    packed_bf16 = pack_params(params, compute_dtype=jnp.bfloat16)
    out = jax.block_until_ready(embed_cnn_forward(sentence, packed_bf16))
    assert out.shape == (BATCH, OUTPUT_DIM)
    assert jnp.allclose(out, ref, atol=1e-1, rtol=1e-1), (out, ref)

    # f32 compute path for tight reference parity.
    packed_f32 = pack_params(params, compute_dtype=jnp.float32)
    out_f32 = jax.block_until_ready(embed_cnn_forward(sentence, packed_f32))
    assert jnp.allclose(out_f32, ref, atol=2e-3, rtol=2e-3), (out_f32, ref)

    print("KERNEL_OK")
</pallas_src>

<mosaic_0001>
module attributes {stable_mosaic.version = 11 : i64} {
  func.func @_embed_cnn_kernel(%arg0: i32, %arg1: memref<2x16xi32, #tpu.memory_space<vmem>>, %arg2: memref<56x32xbf16, #tpu.memory_space<vmem>>, %arg3: memref<160x128xbf16, #tpu.memory_space<vmem>>, %arg4: memref<1x128xf32, #tpu.memory_space<vmem>>, %arg5: memref<128x8xf32, #tpu.memory_space<vmem>>, %arg6: memref<1x8xf32, #tpu.memory_space<vmem>>, %arg7: memref<2x8xf32, #tpu.memory_space<vmem>>) attributes {dimension_semantics = [#tpu.dimension_semantics<parallel>], iteration_bounds = array<i64: 1>, scalar_prefetch = 0 : i64, scratch_operands = 0 : i64, tpu.core_type = #tpu.core_type<tc>, window_params = [{transform_indices = @transform_0, window_bounds = array<i64: 2, 16>}, {pipeline_mode = #tpu.pipeline_mode<synchronous>, transform_indices = @transform_1, window_bounds = array<i64: 56, 32>}, {pipeline_mode = #tpu.pipeline_mode<synchronous>, transform_indices = @transform_2, window_bounds = array<i64: 160, 128>}, {pipeline_mode = #tpu.pipeline_mode<synchronous>, transform_indices = @transform_3, window_bounds = array<i64: 1, 128>}, {pipeline_mode = #tpu.pipeline_mode<synchronous>, transform_indices = @transform_4, window_bounds = array<i64: 128, 8>}, {pipeline_mode = #tpu.pipeline_mode<synchronous>, transform_indices = @transform_5, window_bounds = array<i64: 1, 8>}, {transform_indices = @transform_6, window_bounds = array<i64: 2, 8>}]} {
    %c0 = arith.constant 0 : index
    %c0_0 = arith.constant 0 : index
    %0 = vector.load %arg1[%c0, %c0_0] : memref<2x16xi32, #tpu.memory_space<vmem>>, vector<2x16xi32>
    %1 = vector.shape_cast %0 : vector<2x16xi32> to vector<2x16x1xi32>
    %2 = tpu.iota {dimensions = array<i32: 2>} : vector<2x16x56xi32>
    %3 = vector.broadcast %1 : vector<2x16x1xi32> to vector<2x16x56xi32>
    %4 = arith.cmpi eq, %3, %2 : vector<2x16x56xi32>
    %cst = arith.constant 1.000000e+00 : f32
    %cst_1 = arith.constant 0.000000e+00 : f32
    %5 = vector.broadcast %cst : f32 to vector<2x16x56xf32>
    %6 = vector.broadcast %cst_1 : f32 to vector<2x16x56xf32>
    %7 = arith.select %4, %5, %6 : vector<2x16x56xi1>, vector<2x16x56xf32>
    %8 = arith.truncf %7 : vector<2x16x56xf32> to vector<2x16x56xbf16>
    %9 = vector.shape_cast %8 : vector<2x16x56xbf16> to vector<32x56xbf16>
    %c0_2 = arith.constant 0 : index
    %c0_3 = arith.constant 0 : index
    %10 = vector.load %arg2[%c0_2, %c0_3] : memref<56x32xbf16, #tpu.memory_space<vmem>>, vector<56x32xbf16>
    %cst_4 = arith.constant dense<0.000000e+00> : vector<32x32xf32>
    %11 = tpu.matmul %9, %10, %cst_4 {dimension_numbers = #tpu.dot_dimension_numbers<[1], [0], [0], [1], [0, 0, 1, 1], [], []>} : vector<32x56xbf16>, vector<56x32xbf16>, vector<32x32xf32> -> vector<32x32xf32>
    %c31_i32 = arith.constant 31 : i32
    %12 = tpu.dynamic_rotate %11 by %c31_i32 dim 0 : vector<32x32xf32>, i32 -> vector<32x32xf32>
    %c30_i32 = arith.constant 30 : i32
    %13 = tpu.dynamic_rotate %11 by %c30_i32 dim 0 : vector<32x32xf32>, i32 -> vector<32x32xf32>
    %c29_i32 = arith.constant 29 : i32
    %14 = tpu.dynamic_rotate %11 by %c29_i32 dim 0 : vector<32x32xf32>, i32 -> vector<32x32xf32>
    %c28_i32 = arith.constant 28 : i32
    %15 = tpu.dynamic_rotate %11 by %c28_i32 dim 0 : vector<32x32xf32>, i32 -> vector<32x32xf32>
    %16 = tpu.concatenate %11, %12, %13, %14, %15 in 1 : vector<32x32xf32>, vector<32x32xf32>, vector<32x32xf32>, vector<32x32xf32>, vector<32x32xf32> -> vector<32x160xf32>
    %17 = arith.truncf %16 : vector<32x160xf32> to vector<32x160xbf16>
    %c0_5 = arith.constant 0 : index
    %c0_6 = arith.constant 0 : index
    %18 = vector.load %arg3[%c0_5, %c0_6] : memref<160x128xbf16, #tpu.memory_space<vmem>>, vector<160x128xbf16>
    %cst_7 = arith.constant dense<0.000000e+00> : vector<32x128xf32>
    %19 = tpu.matmul %17, %18, %cst_7 {dimension_numbers = #tpu.dot_dimension_numbers<[1], [0], [0], [1], [0, 0, 1, 1], [], []>} : vector<32x160xbf16>, vector<160x128xbf16>, vector<32x128xf32> -> vector<32x128xf32>
    %20 = vector.shape_cast %19 : vector<32x128xf32> to vector<2x16x128xf32>
    %21 = tpu.iota {dimensions = array<i32: 0>} : vector<16x128xi32>
    %22 = tpu.iota {dimensions = array<i32: 1>} : vector<16x128xi32>
    %c16_i32 = arith.constant 16 : i32
    %23 = vector.broadcast %c16_i32 : i32 to vector<16x128xi32>
    %c0_i32 = arith.constant 0 : i32
    %24 = vector.broadcast %c0_i32 : i32 to vector<16x128xi32>
    %25 = arith.cmpi sge, %22, %24 : vector<16x128xi32>
    %c8_i32 = arith.constant 8 : i32
    %26 = vector.broadcast %c8_i32 : i32 to vector<16x128xi32>
    %27 = arith.cmpi slt, %22, %26 : vector<16x128xi32>
    %28 = arith.andi %25, %27 : vector<16x128xi1>
    %c14_i32 = arith.constant 14 : i32
    %29 = vector.broadcast %c14_i32 : i32 to vector<16x128xi32>
    %30 = arith.select %28, %29, %23 : vector<16x128xi1>, vector<16x128xi32>
    %c8_i32_8 = arith.constant 8 : i32
    %31 = vector.broadcast %c8_i32_8 : i32 to vector<16x128xi32>
    %32 = arith.cmpi sge, %22, %31 : vector<16x128xi32>
    %c16_i32_9 = arith.constant 16 : i32
    %33 = vector.broadcast %c16_i32_9 : i32 to vector<16x128xi32>
    %34 = arith.cmpi slt, %22, %33 : vector<16x128xi32>
    %35 = arith.andi %32, %34 : vector<16x128xi1>
    %c13_i32 = arith.constant 13 : i32
    %36 = vector.broadcast %c13_i32 : i32 to vector<16x128xi32>
    %37 = arith.select %35, %36, %30 : vector<16x128xi1>, vector<16x128xi32>
    %c16_i32_10 = arith.constant 16 : i32
    %38 = vector.broadcast %c16_i32_10 : i32 to vector<16x128xi32>
    %39 = arith.cmpi sge, %22, %38 : vector<16x128xi32>
    %c24_i32 = arith.constant 24 : i32
    %40 = vector.broadcast %c24_i32 : i32 to vector<16x128xi32>
    %41 = arith.cmpi slt, %22, %40 : vector<16x128xi32>
    %42 = arith.andi %39, %41 : vector<16x128xi1>
    %c12_i32 = arith.constant 12 : i32
    %43 = vector.broadcast %c12_i32 : i32 to vector<16x128xi32>
    %44 = arith.select %42, %43, %37 : vector<16x128xi1>, vector<16x128xi32>
    %45 = arith.cmpi slt, %21, %44 : vector<16x128xi32>
    %46 = vector.shape_cast %45 : vector<16x128xi1> to vector<1x16x128xi1>
    %cst_11 = arith.constant 0xFF800000 : f32
    %47 = vector.shape_cast %46 : vector<1x16x128xi1> to vector<1x16x128xi1>
    %48 = vector.broadcast %47 : vector<1x16x128xi1> to vector<2x16x128xi1>
    %49 = vector.broadcast %cst_11 : f32 to vector<2x16x128xf32>
    %50 = arith.select %48, %20, %49 : vector<2x16x128xi1>, vector<2x16x128xf32>
    %cst_12 = arith.constant dense<0xFF800000> : vector<2x128xf32>
    %51 = vector.multi_reduction <maximumf>, %50, %cst_12 [1] : vector<2x16x128xf32> to vector<2x128xf32>
    %c0_13 = arith.constant 0 : index
    %c0_14 = arith.constant 0 : index
    %52 = vector.load %arg4[%c0_13, %c0_14] : memref<1x128xf32, #tpu.memory_space<vmem>>, vector<1x128xf32>
    %53 = vector.broadcast %52 : vector<1x128xf32> to vector<2x128xf32>
    %54 = arith.addf %51, %53 : vector<2x128xf32>
    %cst_15 = arith.constant 0.000000e+00 : f32
    %55 = vector.broadcast %cst_15 : f32 to vector<2x128xf32>
    %56 = arith.maximumf %54, %55 : vector<2x128xf32>
    %57 = tpu.iota {dimensions = array<i32: 1>} : vector<2x128xi32>
    %c24_i32_16 = arith.constant 24 : i32
    %58 = vector.broadcast %c24_i32_16 : i32 to vector<2x128xi32>
    %59 = arith.cmpi slt, %57, %58 : vector<2x128xi32>
    %cst_17 = arith.constant 0x7F800000 : f32
    %60 = vector.broadcast %cst_17 : f32 to vector<2x128xf32>
    %61 = arith.select %59, %56, %60 : vector<2x128xi1>, vector<2x128xf32>
    %cst_18 = arith.constant dense<0x7F800000> : vector<2xf32>
    %62 = vector.multi_reduction <minimumf>, %61, %cst_18 [1] : vector<2x128xf32> to vector<2xf32>
    %63 = vector.shape_cast %62 : vector<2xf32> to vector<2x1xf32>
    %cst_19 = arith.constant 0xFF800000 : f32
    %64 = vector.broadcast %cst_19 : f32 to vector<2x128xf32>
    %65 = arith.select %59, %56, %64 : vector<2x128xi1>, vector<2x128xf32>
    %cst_20 = arith.constant dense<0xFF800000> : vector<2xf32>
    %66 = vector.multi_reduction <maximumf>, %65, %cst_20 [1] : vector<2x128xf32> to vector<2xf32>
    %67 = vector.shape_cast %66 : vector<2xf32> to vector<2x1xf32>
    %68 = arith.subf %67, %63 : vector<2x1xf32>
    %69 = tpu.reciprocal %68 : vector<2x1xf32> -> vector<2x1xf32>
    %70 = vector.broadcast %63 : vector<2x1xf32> to vector<2x128xf32>
    %71 = arith.subf %56, %70 : vector<2x128xf32>
    %72 = vector.broadcast %69 : vector<2x1xf32> to vector<2x128xf32>
    %73 = arith.mulf %71, %72 : vector<2x128xf32>
    %c0_21 = arith.constant 0 : index
    %c0_22 = arith.constant 0 : index
    %74 = vector.load %arg5[%c0_21, %c0_22] : memref<128x8xf32, #tpu.memory_space<vmem>>, vector<128x8xf32>
    %cst_23 = arith.constant dense<0.000000e+00> : vector<2x8xf32>
    %75 = tpu.matmul %73, %74, %cst_23 {dimension_numbers = #tpu.dot_dimension_numbers<[1], [0], [0], [1], [0, 0, 1, 1], [], []>} : vector<2x128xf32>, vector<128x8xf32>, vector<2x8xf32> -> vector<2x8xf32>
    %c0_24 = arith.constant 0 : index
    %c0_25 = arith.constant 0 : index
    %76 = vector.load %arg6[%c0_24, %c0_25] : memref<1x8xf32, #tpu.memory_space<vmem>>, vector<1x8xf32>
    %77 = vector.broadcast %76 : vector<1x8xf32> to vector<2x8xf32>
    %78 = arith.addf %75, %77 : vector<2x8xf32>
    %c0_26 = arith.constant 0 : index
    %c0_27 = arith.constant 0 : index
    %79 = vector.load %arg7[%c0_26, %c0_27] : memref<2x8xf32, #tpu.memory_space<vmem>>, vector<2x8xf32>
    tpu.vector_store %arg7[%c0_26, %c0_27], %78 {strides = array<i32>} : memref<2x8xf32, #tpu.memory_space<vmem>>, vector<2x8xf32>,
    return
  }
  func.func @transform_0(%arg0: i32) -> (i32, i32) {
    %c0_i32 = arith.constant 0 : i32
    %c0_i32_0 = arith.constant 0 : i32
    return %arg0, %c0_i32 : i32, i32
  }
  func.func @transform_1(%arg0: i32) -> (i32, i32) {
    %c0_i32 = arith.constant 0 : i32
    %c0_i32_0 = arith.constant 0 : i32
    %c0_i32_1 = arith.constant 0 : i32
    return %c0_i32, %c0_i32_0 : i32, i32
  }
  func.func @transform_2(%arg0: i32) -> (i32, i32) {
    %c0_i32 = arith.constant 0 : i32
    %c0_i32_0 = arith.constant 0 : i32
    %c0_i32_1 = arith.constant 0 : i32
    return %c0_i32, %c0_i32_0 : i32, i32
  }
  func.func @transform_3(%arg0: i32) -> (i32, i32) {
    %c0_i32 = arith.constant 0 : i32
    %c0_i32_0 = arith.constant 0 : i32
    %c0_i32_1 = arith.constant 0 : i32
    return %c0_i32, %c0_i32_0 : i32, i32
  }
  func.func @transform_4(%arg0: i32) -> (i32, i32) {
    %c0_i32 = arith.constant 0 : i32
    %c0_i32_0 = arith.constant 0 : i32
    %c0_i32_1 = arith.constant 0 : i32
    return %c0_i32, %c0_i32_0 : i32, i32
  }
  func.func @transform_5(%arg0: i32) -> (i32, i32) {
    %c0_i32 = arith.constant 0 : i32
    %c0_i32_0 = arith.constant 0 : i32
    %c0_i32_1 = arith.constant 0 : i32
    return %c0_i32, %c0_i32_0 : i32, i32
  }
  func.func @transform_6(%arg0: i32) -> (i32, i32) {
    %c0_i32 = arith.constant 0 : i32
    %c0_i32_0 = arith.constant 0 : i32
    return %arg0, %c0_i32 : i32, i32
  }
}

</mosaic_0001>

<llo_original>
// kernel: tpu_custom_call.1
$region0: #{tpu_custom_call.1}
  #allocation0 [shape = 'u32[]', space=smem, size = 0x4, offset = 0x4, fixed_abs, tag = 'smem constant byte address 0x4 - core index']
  #allocation1 [shape = 'u32[144,128]{1,0:T(1,128)}', space=vmem, size = 0x12000, scoped, tag = 'internal scratch']
  %s0 = inlined_call_operand.vmem [shape: s32[2,16], index: 0, kind: input, shape index: {}]
  %s1 = inlined_call_operand.vmem [shape: bf16[56,32], index: 1, kind: input, shape index: {}]
  %s2 = inlined_call_operand.vmem [shape: bf16[160,128], index: 2, kind: input, shape index: {}]
  %s3 = inlined_call_operand.vmem [shape: f32[1,128], index: 3, kind: input, shape index: {}]
  %s4 = inlined_call_operand.vmem [shape: f32[128,8], index: 4, kind: input, shape index: {}]
  %s5 = inlined_call_operand.vmem [shape: f32[1,8], index: 5, kind: input, shape index: {}]
  %s6 = inlined_call_operand.hbm [shape: f32[2,8], index: 6, kind: output, shape index: {}]
  %s7 = sld [smem:[#allocation0]]
  $region34: #{tpu_custom_call.1} parent=0
    _
  %s9 = ssub.s32 1, %s7
  %s10 = scalar_select 0, %s9, %s7
  $region1: #{tpu_custom_call.1} parent=0
    #allocation2 [shape = 'u8[1024]{0}', space=vmem, size = 0x400, scoped, tag = 'output window, operand 0, single buffered']
    #allocation3 [shape = 's32[1]{0}', space=sflag, size = 0x4, scoped, tag = 'scoped memory for tpu_custom_call.1']
    %11 = vsyncpa [#allocation3], 0
    // Predicated region
    $region2: #{tpu_custom_call.1} parent=1 // pred_check
      _
    $region3: #{tpu_custom_call.1} parent=1 // pred_check_branch
      %13 = sbr.rel (0) target = $region5
    $region4: #{tpu_custom_call.1} parent=1 // pred_region
      _
    $region5: #{tpu_custom_call.1} parent=1 // pred_fallthru
      _
    // Predicated region
    $region6: #{tpu_custom_call.1} parent=1 // pred_check
      _
    $region7: #{tpu_custom_call.1} parent=1 // pred_check_branch
      %15 = sbr.rel (0) target = $region9
    $region8: #{tpu_custom_call.1} parent=1 // pred_region
      _
    $region9: #{tpu_custom_call.1} parent=1 // pred_fallthru
      _
    // Predicated region
    $region10: #{tpu_custom_call.1} parent=1 // pred_check
      _
    $region11: #{tpu_custom_call.1} parent=1 // pred_check_branch
      %17 = sbr.rel (0) target = $region13
    $region12: #{tpu_custom_call.1} parent=1 // pred_region
      _
    $region13: #{tpu_custom_call.1} parent=1 // pred_fallthru
      _
    // Predicated region
    $region14: #{tpu_custom_call.1} parent=1 // pred_check
      _
    $region15: #{tpu_custom_call.1} parent=1 // pred_check_branch
      %19 = sbr.rel (0) target = $region17
    $region16: #{tpu_custom_call.1} parent=1 // pred_region
      _
    $region17: #{tpu_custom_call.1} parent=1 // pred_fallthru
      _
    // Predicated region
    $region18: #{tpu_custom_call.1} parent=1 // pred_check
      _
    $region19: #{tpu_custom_call.1} parent=1 // pred_check_branch
      %21 = sbr.rel (0) target = $region21
    $region20: #{tpu_custom_call.1} parent=1 // pred_region
      _
    $region21: #{tpu_custom_call.1} parent=1 // pred_fallthru
      _
    // Predicated region
    $region22: #{tpu_custom_call.1} parent=1 // pred_check
      _
    $region23: #{tpu_custom_call.1} parent=1 // pred_check_branch
      %23 = sbr.rel (0) target = $region25
    $region24: #{tpu_custom_call.1} parent=1 // pred_region
      _
    $region25: #{tpu_custom_call.1} parent=1 // pred_fallthru
      _
    %v25 = vld [vmem:[%s0] sm:$0x3]
    %v26 = vlaneseq
    %v27 = vshrl.u32 %v26, 7
    %v28 = vsub.s32 0, %v27
    %v29 = vrot.slane %v25, %v28
    %31 = vbcast.lane.b32.xlu0 %v29, 256
    %v32 = vpop.permute.xlu0 %31
    %s34 = sor.u32 256, 8
    %35 = vbcast.lane.b32.xlu0 %v29, %s34
    %v36 = vpop.permute.xlu0 %35
    %v37 = vlaneseq
    %v38 = vshrl.u32 %v37, 7
    %v39 = vsub.s32 1, %v38
    %v40 = vrot.slane %v25, %v39
    %42 = vbcast.lane.b32.xlu0 %v40, 256
    %v43 = vpop.permute.xlu0 %42
    %s45 = sor.u32 256, 8
    %46 = vbcast.lane.b32.xlu0 %v40, %s45
    %v47 = vpop.permute.xlu0 %46
    %v48 = vlaneseq
    %v49 = vand.u32 %v48, 127
    %vm50 = vcmp.eq.s32.totalorder %v32, %v49
    %vm51 = vcmp.eq.s32.totalorder %v36, %v49
    %vm52 = vcmp.eq.s32.totalorder %v43, %v49
    %vm53 = vcmp.eq.s32.totalorder %v47, %v49
    %v54 = vsel %vm50, 1.0, 0.0
    %v55 = vsel %vm51, 1.0, 0.0
    %v56 = vsel %vm52, 1.0, 0.0
    %v57 = vsel %vm53, 1.0, 0.0
    %v58 = vpack.c.bf16 %v55, %v54
    %v59 = vpack.c.bf16 %v57, %v56
    %v60 = vld [vmem:[%s1] sm:$0xf]
    %v61 = vld [vmem:[%s1 + $0x4] sm:$0xf]
    %v62 = vld [vmem:[%s1 + $0x8] sm:$0xf]
    %v63 = vld [vmem:[%s1 + $0xc] sm:$0xf]
    %v64 = vld [vmem:[%s1 + $0x10] sm:$0xf]
    %v65 = vld [vmem:[%s1 + $0x14] sm:$0xf]
    %v66 = vld [vmem:[%s1 + $0x18] sm:$0xf]
    %v74 = vunpack.c.l.b16 %v60
    %v75 = vunpack.c.l.b16 %v61
    %v76 = vunpack.c.l.b16 %v62
    %v77 = vunpack.c.l.b16 %v63
    %v78 = vunpack.c.l.b16 %v64
    %v79 = vunpack.c.l.b16 %v65
    %v80 = vunpack.c.l.b16 %v66
    %v81 = vpack.c.b16 %v75, %v74
    %v82 = vpack.c.b16 %v77, %v76
    %v83 = vpack.c.b16 %v79, %v78
    %v84 = vpack.c.b16 %v80, %v80
    %vm88 = vcmask 457728
    %v90 = vsel %vm88, %v58, 0
    %v93 = vsel %vm88, %v59, 0
    %vm95 = vcmask 1043456
    %v97 = vsel %vm95, %v84, 0
    %99 = vmatprep.subr.bf16.mxu0 0
    %100 = vmatpush1.bf16.msra.mxu0 0
    %101 = vmatprep.subr.bf16.mxu0 0
    %102 = vmatpush1.bf16.msra.mxu0 0
    %103 = vmatprep.subr.bf16.mxu0 0
    %104 = vmatpush1.bf16.msra.mxu0 0
    %105 = vmatprep.subr.bf16.mxu0 0
    %106 = vmatpush1.bf16.msra.mxu0 0
    %107 = vmatprep.subr.bf16.mxu0 0
    %108 = vmatpush1.bf16.msra.mxu0 %v97
    %109 = vmatprep.subr.bf16.mxu0 0
    %110 = vmatpush1.bf16.msra.mxu0 %v83
    %111 = vmatprep.subr.bf16.mxu0 0
    %112 = vmatpush1.bf16.msra.mxu0 %v82
    %113 = vmatprep.subr.bf16.mxu0 0
    %114 = vmatpush1.bf16.msra.mxu0 %v81
    %115 = vmatprep.subr.bf16.mxu0 0
    %116 = vmatpush2.bf16.msra.mxu0 0
    %117 = vmatprep.subr.bf16.mxu0 0
    %118 = vmatpush2.bf16.msra.mxu0 0
    %119 = vmatprep.subr.bf16.mxu0 0
    %120 = vmatpush2.bf16.msra.mxu0 0
    %121 = vmatprep.subr.bf16.mxu0 0
    %122 = vmatpush2.bf16.msra.mxu0 0
    %123 = vmatprep.subr.bf16.mxu0 0
    %124 = vmatpush2.bf16.msra.mxu0 0
    %125 = vmatprep.subr.bf16.mxu0 0
    %126 = vmatpush2.bf16.msra.mxu0 0
    %127 = vmatprep.subr.bf16.mxu0 0
    %128 = vmatpush2.bf16.msra.mxu0 0
    %129 = vmatprep.subr.bf16.mxu0 0
    %130 = vmatpush2.bf16.msra.mxu0 0
    %131 = vmatprep.mubr.bf16.mxu0 0
    %132 = vmatmul.mubr.bf16.gmra.mxu0 %v90
    %v133 = vpop.f32.mrf.mxu0
    %v134 = vadd.f32 0.0, %v133
    %v135 = vpop.f32.mrf.mxu0
    %v136 = vpop.f32.mrf.mxu0
    %v137 = vadd.f32 0.0, %v136
    %v138 = vpop.f32.mrf.mxu0
    %139 = vmatprep.mubr.bf16.mxu0 0
    %140 = vmatmul.mubr.bf16.gmra.mxu0 %v93
    %v141 = vpop.f32.mrf.mxu0
    %v142 = vadd.f32 0.0, %v141
    %v143 = vpop.f32.mrf.mxu0
    %v144 = vpop.f32.mrf.mxu0
    %v145 = vadd.f32 0.0, %v144
    %v146 = vpop.f32.mrf.mxu0
    %147 = vdwg.mxu0
    %v148 = vrot.slane %v134, 1
    %v149 = vrot.slane %v137, 1
    %v150 = vrot.slane %v142, 1
    %v151 = vrot.slane %v145, 1
    %v152 = vlaneseq
    %v153 = vshrl.u32 %v152, 7
    %vm154 = vcmp.lt.s32.totalorder %v153, 7
    %v155 = vsel %vm154, %v150, %v151
    %v156 = vsel %vm154, %v149, %v150
    %v157 = vsel %vm154, %v148, %v149
    %v158 = vsel %vm154, %v151, %v148
    %v159 = vrot.slane %v134, 2
    %v160 = vrot.slane %v137, 2
    %v161 = vrot.slane %v142, 2
    %v162 = vrot.slane %v145, 2
    %vm163 = vcmp.lt.s32.totalorder %v153, 6
    %v164 = vsel %vm163, %v161, %v162
    %v165 = vsel %vm163, %v160, %v161
    %v166 = vsel %vm163, %v159, %v160
    %v167 = vsel %vm163, %v162, %v159
    %v168 = vrot.slane %v134, 3
    %v169 = vrot.slane %v137, 3
    %v170 = vrot.slane %v142, 3
    %v171 = vrot.slane %v145, 3
    %vm172 = vcmp.lt.s32.totalorder %v153, 5
    %v173 = vsel %vm172, %v170, %v171
    %v174 = vsel %vm172, %v169, %v170
    %v175 = vsel %vm172, %v168, %v169
    %v176 = vsel %vm172, %v171, %v168
    %v177 = vrot.slane %v134, 4
    %v178 = vrot.slane %v137, 4
    %v179 = vrot.slane %v142, 4
    %v180 = vrot.slane %v145, 4
    %vm181 = vcmp.lt.s32.totalorder %v153, 4
    %v182 = vsel %vm181, %v179, %v180
    %v183 = vsel %vm181, %v178, %v179
    %v184 = vsel %vm181, %v177, %v178
    %v185 = vsel %vm181, %v180, %v177
    %190 = vrot.lane.b32.xlu0 %v157, 32
    %v191 = vpop.permute.xlu0 %190
    %192 = vrot.lane.b32.xlu0 %v156, 32
    %v193 = vpop.permute.xlu0 %192
    %194 = vrot.lane.b32.xlu0 %v155, 32
    %v195 = vpop.permute.xlu0 %194
    %196 = vrot.lane.b32.xlu0 %v158, 32
    %v197 = vpop.permute.xlu0 %196
    %206 = vrot.lane.b32.xlu0 %v166, 64
    %v207 = vpop.permute.xlu0 %206
    %208 = vrot.lane.b32.xlu0 %v165, 64
    %v209 = vpop.permute.xlu0 %208
    %210 = vrot.lane.b32.xlu0 %v164, 64
    %v211 = vpop.permute.xlu0 %210
    %212 = vrot.lane.b32.xlu0 %v167, 64
    %v213 = vpop.permute.xlu0 %212
    %222 = vrot.lane.b32.xlu0 %v175, 96
    %v223 = vpop.permute.xlu0 %222
    %224 = vrot.lane.b32.xlu0 %v174, 96
    %v225 = vpop.permute.xlu0 %224
    %226 = vrot.lane.b32.xlu0 %v173, 96
    %v227 = vpop.permute.xlu0 %226
    %228 = vrot.lane.b32.xlu0 %v176, 96
    %v229 = vpop.permute.xlu0 %228
    %vm234 = vcmask 261120
    %v235 = vsel %vm234, %v134, %v191
    %v236 = vsel %vm234, %v137, %v193
    %v237 = vsel %vm234, %v142, %v195
    %v238 = vsel %vm234, %v145, %v197
    %vm239 = vcmask 523264
    %v240 = vsel %vm239, %v235, %v207
    %v241 = vsel %vm239, %v236, %v209
    %v242 = vsel %vm239, %v237, %v211
    %v243 = vsel %vm239, %v238, %v213
    %vm244 = vcmask 785408
    %v245 = vsel %vm244, %v240, %v223
    %v246 = vsel %vm244, %v241, %v225
    %v247 = vsel %vm244, %v242, %v227
    %v248 = vsel %vm244, %v243, %v229
    %v249 = vpack.c.bf16 %v246, %v245
    %v250 = vpack.c.bf16 %v183, %v184
    %v251 = vpack.c.bf16 %v248, %v247
    %v252 = vpack.c.bf16 %v185, %v182
    %v253 = vld [vmem:[%s2] sm:$0xf]
    %v254 = vld [vmem:[%s2 + $0x4] sm:$0xf]
    %v255 = vld [vmem:[%s2 + $0x8] sm:$0xf]
    %v256 = vld [vmem:[%s2 + $0xc] sm:$0xf]
    %v257 = vld [vmem:[%s2 + $0x10] sm:$0xf]
    %v258 = vld [vmem:[%s2 + $0x14] sm:$0xf]
    %v259 = vld [vmem:[%s2 + $0x18] sm:$0xf]
    %v260 = vld [vmem:[%s2 + $0x1c] sm:$0xf]
    %v261 = vld [vmem:[%s2 + $0x20] sm:$0xf]
    %v262 = vld [vmem:[%s2 + $0x24] sm:$0xf]
    %v263 = vld [vmem:[%s2 + $0x28] sm:$0xf]
    %v264 = vld [vmem:[%s2 + $0x2c] sm:$0xf]
    %v265 = vld [vmem:[%s2 + $0x30] sm:$0xf]
    %v266 = vld [vmem:[%s2 + $0x34] sm:$0xf]
    %v267 = vld [vmem:[%s2 + $0x38] sm:$0xf]
    %v268 = vld [vmem:[%s2 + $0x3c] sm:$0xf]
    %v269 = vld [vmem:[%s2 + $0x40] sm:$0xf]
    %v270 = vld [vmem:[%s2 + $0x44] sm:$0xf]
    %v271 = vld [vmem:[%s2 + $0x48] sm:$0xf]
    %v272 = vld [vmem:[%s2 + $0x4c] sm:$0xf]
    %v293 = vunpack.c.l.b16 %v253
    %v294 = vunpack.c.l.b16 %v254
    %v295 = vunpack.c.l.b16 %v255
    %v296 = vunpack.c.l.b16 %v256
    %v297 = vunpack.c.l.b16 %v257
    %v298 = vunpack.c.l.b16 %v258
    %v299 = vunpack.c.l.b16 %v259
    %v300 = vunpack.c.l.b16 %v260
    %v301 = vunpack.c.l.b16 %v261
    %v302 = vunpack.c.l.b16 %v262
    %v303 = vunpack.c.l.b16 %v263
    %v304 = vunpack.c.l.b16 %v264
    %v305 = vunpack.c.l.b16 %v265
    %v306 = vunpack.c.l.b16 %v266
    %v307 = vunpack.c.l.b16 %v267
    %v308 = vunpack.c.l.b16 %v268
    %v309 = vunpack.c.l.b16 %v269
    %v310 = vunpack.c.l.b16 %v270
    %v311 = vunpack.c.l.b16 %v271
    %v312 = vunpack.c.l.b16 %v272
    %v313 = vpack.c.b16 %v294, %v293
    %v314 = vpack.c.b16 %v296, %v295
    %v315 = vpack.c.b16 %v298, %v297
    %v316 = vpack.c.b16 %v300, %v299
    %v317 = vpack.c.b16 %v302, %v301
    %v318 = vpack.c.b16 %v304, %v303
    %v319 = vpack.c.b16 %v306, %v305
    %v320 = vpack.c.b16 %v308, %v307
    %v321 = vpack.c.b16 %v310, %v309
    %v322 = vpack.c.b16 %v312, %v311
    %v334 = vsel %vm234, %v250, 0
    %v337 = vsel %vm234, %v252, 0
    %339 = vmatprep.subr.bf16.mxu0 0
    %340 = vmatpush1.bf16.msra.mxu0 %v320
    %341 = vmatprep.subr.bf16.mxu0 0
    %342 = vmatpush1.bf16.msra.mxu0 %v319
    %343 = vmatprep.subr.bf16.mxu0 0
    %344 = vmatpush1.bf16.msra.mxu0 %v318
    %345 = vmatprep.subr.bf16.mxu0 0
    %346 = vmatpush1.bf16.msra.mxu0 %v317
    %347 = vmatprep.subr.bf16.mxu0 0
    %348 = vmatpush1.bf16.msra.mxu0 %v316
    %349 = vmatprep.subr.bf16.mxu0 0
    %350 = vmatpush1.bf16.msra.mxu0 %v315
    %351 = vmatprep.subr.bf16.mxu0 0
    %352 = vmatpush1.bf16.msra.mxu0 %v314
    %353 = vmatprep.subr.bf16.mxu0 0
    %354 = vmatpush1.bf16.msra.mxu0 %v313
    %355 = vmatprep.subr.bf16.mxu0 0
    %356 = vmatpush2.bf16.msra.mxu0 0
    %357 = vmatprep.subr.bf16.mxu0 0
    %358 = vmatpush2.bf16.msra.mxu0 0
    %359 = vmatprep.subr.bf16.mxu0 0
    %360 = vmatpush2.bf16.msra.mxu0 0
    %361 = vmatprep.subr.bf16.mxu0 0
    %362 = vmatpush2.bf16.msra.mxu0 0
    %363 = vmatprep.subr.bf16.mxu0 0
    %364 = vmatpush2.bf16.msra.mxu0 0
    %365 = vmatprep.subr.bf16.mxu0 0
    %366 = vmatpush2.bf16.msra.mxu0 0
    %367 = vmatprep.subr.bf16.mxu0 0
    %368 = vmatpush2.bf16.msra.mxu0 %v322
    %369 = vmatprep.subr.bf16.mxu0 0
    %370 = vmatpush2.bf16.msra.mxu0 %v321
    %371 = vmatprep.mubr.bf16.mxu0 %v334
    %372 = vmatmul.mubr.bf16.gmra.mxu0 %v249
    %v373 = vpop.f32.mrf.mxu0
    %v374 = vadd.f32 0.0, %v373
    %v375 = vpop.f32.mrf.mxu0
    %v376 = vpop.f32.mrf.mxu0
    %v377 = vadd.f32 0.0, %v376
    %v378 = vpop.f32.mrf.mxu0
    %379 = vmatprep.mubr.bf16.mxu0 %v337
    %380 = vmatmul.mubr.bf16.gmra.mxu0 %v251
    %v381 = vpop.f32.mrf.mxu0
    %v382 = vadd.f32 0.0, %v381
    %v383 = vpop.f32.mrf.mxu0
    %v384 = vpop.f32.mrf.mxu0
    %v385 = vadd.f32 0.0, %v384
    %v386 = vpop.f32.mrf.mxu0
    %387 = vdwg.mxu0
    %v388 = vadd.s32 %v153, 8
    %vm389 = vcmp.ge.s32.totalorder %v49, 0
    %vm390 = vcmp.lt.s32.totalorder %v49, 8
    %vm391 = vmand %vm389, %vm390
    %v392 = vsel %vm391, 14, 16
    %vm393 = vcmp.ge.s32.totalorder %v49, 8
    %vm394 = vcmp.lt.s32.totalorder %v49, 16
    %vm395 = vmand %vm393, %vm394
    %v396 = vsel %vm395, 13, %v392
    %vm397 = vcmp.ge.s32.totalorder %v49, 16
    %vm398 = vcmp.lt.s32.totalorder %v49, 24
    %vm399 = vmand %vm397, %vm398
    %v400 = vsel %vm399, 12, %v396
    %vm401 = vcmp.lt.s32.totalorder %v153, %v400
    %vm402 = vcmp.lt.s32.totalorder %v388, %v400
    %v403 = vsel %vm401, 1, 0
    %v404 = vsel %vm402, 1, 0
    %vm405 = vcmp.eq.s32.totalorder %v403, 1
    %vm406 = vcmp.eq.s32.totalorder %v404, 1
    %v407 = vsel %vm405, %v374, -inf
    %v408 = vsel %vm406, %v377, -inf
    %v409 = vsel %vm405, %v382, -inf
    %v410 = vsel %vm406, %v385, -inf
    %v411 = vmax.f32 %v407, %v408
    %v412 = vrot.slane %v411, 4
    %v413 = vmax.f32 %v411, %v412
    %v414 = vrot.slane %v413, 2
    %v415 = vmax.f32 %v413, %v414
    %v416 = vrot.slane %v415, 1
    %v417 = vmax.f32 %v415, %v416
    %v418 = vmax.f32 %v409, %v410
    %v419 = vrot.slane %v418, 4
    %v420 = vmax.f32 %v418, %v419
    %v421 = vrot.slane %v420, 2
    %v422 = vmax.f32 %v420, %v421
    %v423 = vrot.slane %v422, 1
    %v424 = vmax.f32 %v422, %v423
    %v425 = vld [vmem:[%s3] sm:$0x1]
    %v427 = vlaneseq
    %v428 = vshrl.u32 %v427, 7
    %v429 = vsub.s32 0, %v428
    %v430 = vrot.slane %v425, %v429
    %v432 = vadd.f32 %v417, %v430
    %v433 = vadd.f32 %v424, %v430
    %v434 = vmax.f32 %v432, 0.0
    %v435 = vmax.f32 %v433, 0.0
    %v438 = vrot.slane %v435, 7
    %vm439 = vcmask 1041409
    %v440 = vsel %vm439, %v438, %v434
    %v442 = vsel %vm398, %v440, inf
    %vm443 = vcmask 1041408
    %v444 = vsel %vm443, %v442, inf
    %445 = vmin.xlane.f32.xlu0 %v444
    %v446 = vpop.xlane.xlu0 %445
    %v447 = vsel %vm398, %v440, -inf
    %v448 = vsel %vm443, %v447, -inf
    %449 = vmax.xlane.f32.xlu0 %v448
    %v450 = vpop.xlane.xlu0 %449
    %v451 = vsub.f32 %v450, %v446
    %v452 = vrcp.pop %v451
    %v454 = vrot.slane %v446, 1
    %v457 = vsub.f32 %v434, %v446
    %v458 = vsub.f32 %v435, %v454
    %v460 = vrot.slane %v452, 1
    %v463 = vmul.f32 %v457, %v452
    %v464 = vmul.f32 %v458, %v460
    %v465 = vld [vmem:[%s4] sm:$0xff]
    %v466 = vld [vmem:[%s4 + $0x8] sm:$0xff]
    %v467 = vld [vmem:[%s4 + $0x10] sm:$0xff]
    %v468 = vld [vmem:[%s4 + $0x18] sm:$0xff]
    %v469 = vld [vmem:[%s4 + $0x20] sm:$0xff]
    %v470 = vld [vmem:[%s4 + $0x28] sm:$0xff]
    %v471 = vld [vmem:[%s4 + $0x30] sm:$0xff]
    %v472 = vld [vmem:[%s4 + $0x38] sm:$0xff]
    %v473 = vld [vmem:[%s4 + $0x40] sm:$0xff]
    %v474 = vld [vmem:[%s4 + $0x48] sm:$0xff]
    %v475 = vld [vmem:[%s4 + $0x50] sm:$0xff]
    %v476 = vld [vmem:[%s4 + $0x58] sm:$0xff]
    %v477 = vld [vmem:[%s4 + $0x60] sm:$0xff]
    %v478 = vld [vmem:[%s4 + $0x68] sm:$0xff]
    %v479 = vld [vmem:[%s4 + $0x70] sm:$0xff]
    %v480 = vld [vmem:[%s4 + $0x78] sm:$0xff]
    %v481 = vld [vmem:[%s5] sm:$0x1]
    %v483 = vlaneseq
    %v484 = vshrl.u32 %v483, 7
    %v485 = vsub.s32 0, %v484
    %v486 = vrot.slane %v481, %v485
    %v490 = vrot.slane %v464, 7
    %v491 = vsel %vm439, %v490, %v463
    %493 = vmatprep.subr.mxu0 0.0
    %494 = vmatpush1.msra.mxu0 %v480
    %495 = vmatprep.subr.mxu0 0.0
    %496 = vmatpush1.msra.mxu0 %v479
    %497 = vmatprep.subr.mxu0 0.0
    %498 = vmatpush1.msra.mxu0 %v478
    %499 = vmatprep.subr.mxu0 0.0
    %500 = vmatpush1.msra.mxu0 %v477
    %501 = vmatprep.subr.mxu0 0.0
    %502 = vmatpush1.msra.mxu0 %v476
    %503 = vmatprep.subr.mxu0 0.0
    %504 = vmatpush1.msra.mxu0 %v475
    %505 = vmatprep.subr.mxu0 0.0
    %506 = vmatpush1.msra.mxu0 %v474
    %507 = vmatprep.subr.mxu0 0.0
    %508 = vmatpush1.msra.mxu0 %v473
    %509 = vmatprep.subr.mxu0 0.0
    %510 = vmatpush1.msra.mxu0 %v472
    %511 = vmatprep.subr.mxu0 0.0
    %512 = vmatpush1.msra.mxu0 %v471
    %513 = vmatprep.subr.mxu0 0.0
    %514 = vmatpush1.msra.mxu0 %v470
    %515 = vmatprep.subr.mxu0 0.0
    %516 = vmatpush1.msra.mxu0 %v469
    %517 = vmatprep.subr.mxu0 0.0
    %518 = vmatpush1.msra.mxu0 %v468
    %519 = vmatprep.subr.mxu0 0.0
    %520 = vmatpush1.msra.mxu0 %v467
    %521 = vmatprep.subr.mxu0 0.0
    %522 = vmatpush1.msra.mxu0 %v466
    %523 = vmatprep.subr.mxu0 0.0
    %524 = vmatpush1.msra.mxu0 %v465
    %525 = vmatprep.subr.mxu0 0.0
    %526 = vmatpush2.msra.mxu0 0.0
    %527 = vmatprep.subr.mxu0 0.0
    %528 = vmatpush2.msra.mxu0 0.0
    %529 = vmatprep.subr.mxu0 0.0
    %530 = vmatpush2.msra.mxu0 0.0
    %531 = vmatprep.subr.mxu0 0.0
    %532 = vmatpush2.msra.mxu0 0.0
    %533 = vmatprep.subr.mxu0 0.0
    %534 = vmatpush2.msra.mxu0 0.0
    %535 = vmatprep.subr.mxu0 0.0
    %536 = vmatpush2.msra.mxu0 0.0
    %537 = vmatprep.subr.mxu0 0.0
    %538 = vmatpush2.msra.mxu0 0.0
    %539 = vmatprep.subr.mxu0 0.0
    %540 = vmatpush2.msra.mxu0 0.0
    %541 = vmatprep.subr.mxu0 0.0
    %542 = vmatpush2.msra.mxu0 0.0
    %543 = vmatprep.subr.mxu0 0.0
    %544 = vmatpush2.msra.mxu0 0.0
    %545 = vmatprep.subr.mxu0 0.0
    %546 = vmatpush2.msra.mxu0 0.0
    %547 = vmatprep.subr.mxu0 0.0
    %548 = vmatpush2.msra.mxu0 0.0
    %549 = vmatprep.subr.mxu0 0.0
    %550 = vmatpush2.msra.mxu0 0.0
    %551 = vmatprep.subr.mxu0 0.0
    %552 = vmatpush2.msra.mxu0 0.0
    %553 = vmatprep.subr.mxu0 0.0
    %554 = vmatpush2.msra.mxu0 0.0
    %555 = vmatprep.subr.mxu0 0.0
    %556 = vmatpush2.msra.mxu0 0.0
    %557 = vmatprep.mubr.f32.mxu0 0.0
    %558 = vmatmul.mubr.f32.gmra.mxu0 %v491
    %v559 = vpop.f32.mrf.mxu0
    %v560 = vadd.f32 %v486, %v559
    %v561 = vpop.f32.mrf.mxu0
    %562 = vdwg.mxu0
    %vm563 = vcmask 58368
    %564 = vst.msk [vmem:[#allocation2] sm:$0x3] %vm563, %v560
    // Predicated region
    $region26: #{tpu_custom_call.1} parent=1 // pred_check
      _
    $region27: #{tpu_custom_call.1} parent=1 // pred_check_branch
      %566 = sbr.rel (0) target = $region29
    $region28: #{tpu_custom_call.1} parent=1 // pred_region
      %s568 = ssub.s32 32, 32
      %569 = vsyncadd [#allocation3], %s568
      %s571 = sshll.u32 [#allocation2], 4
      %s572 = int_to_ptr.vmem [resolvable:$true] %s571
      %574 = dma.vmem_to_hbm [thread:$0]  %s572, 32, %s6, [#allocation3]
    $region29: #{tpu_custom_call.1} parent=1 // pred_fallthru
      _
    // Predicated region
    $region30: #{tpu_custom_call.1} parent=1 // pred_check
      _
    $region31: #{tpu_custom_call.1} parent=1 // pred_check_branch
      %576 = sbr.rel (0) target = $region33
    $region32: #{tpu_custom_call.1} parent=1 // pred_region
      %577 = dma.done [#allocation3], 32
    $region33: #{tpu_custom_call.1} parent=1 // pred_fallthru
      _
    %578 = vsyncpa [#allocation3], 1

</llo_original>
